<compile_context>
chip_gen: v7x
topology: tpu7x:2x2x1
jax: 0.10.0
libtpu: 0.0.40
codegen_flags: <defaults>
</compile_context>

<pallas_src>
import functools
import math

import jax
import jax.numpy as jnp
import numpy as np
from jax import lax
from jax.experimental import pallas as pl
from jax.experimental.pallas import tpu as pltpu

_MIX1 = 0x9E3779B1  # golden-ratio Weyl step
_MIX2 = 0x21F0AAAD  # lowbias32-style multiplier


def _cdiv(a: int, b: int) -> int:
    return -(-a // b)


def _round_up(n: int, m: int) -> int:
    return _cdiv(n, m) * m


def _vdropout_kernel(seed_ref, lanevec_ref, x_ref, o_ref, *,
                     log2_g: int, threshold32: int, inv_keep: float):
    """One lane-dense (TR, G*V) tile: per-vector Bernoulli mask + scale."""
    tr, gv = x_ref.shape
    row0 = pl.program_id(0) * tr
    seed_u = seed_ref[0].astype(jnp.uint32)

    # Global vector index per element; the V lanes of one vector share it,
    # hence share the mask bit.  All int32, no reshapes / lane repeats.
    row_iota = lax.broadcasted_iota(jnp.int32, (tr, gv), 0)
    gvec = ((row0 + row_iota) << log2_g) + lanevec_ref[...]       # (tr, gv)

    # 2-round stateless counter mixer in uint32 (logical shifts, wrapping mul).
    h = pltpu.bitcast(gvec, jnp.uint32)
    h = (h + seed_u) * jnp.uint32(_MIX1)
    h = h ^ (h >> 16)
    h = h * jnp.uint32(_MIX2)
    h = h ^ (h >> 15)

    keep = h < jnp.uint32(threshold32)        # P(keep) = threshold32 / 2^32
    scale = jnp.where(keep,
                      jnp.asarray(inv_keep, dtype=x_ref.dtype),
                      jnp.asarray(0, dtype=x_ref.dtype))
    o_ref[...] = x_ref[...] * scale


def _keep_mask_flat(n_vec: int, seed32: int, threshold32: int):
    """Plain-JAX replica of the in-kernel hash (same counters -> same bits)."""
    idx = jnp.arange(n_vec, dtype=jnp.uint32)
    h = (idx + jnp.uint32(seed32)) * jnp.uint32(_MIX1)
    h = h ^ (h >> 16)
    h = h * jnp.uint32(_MIX2)
    h = h ^ (h >> 15)
    return h < jnp.uint32(threshold32)


def vdropout(x, drop_rate: float, seed: int, training: bool = True,
             use_pallas=None):
    """JAX wrapper reproducing _VDropout.forward."""
    if not training or drop_rate <= 0.0 or x.size == 0:
        return x
    if drop_rate >= 1.0:
        # PyTorch would yield 0 * inf = NaN; return the all-dropped result.
        return jnp.zeros_like(x)

    keep_prob = 1.0 - drop_rate
    inv_keep = 1.0 / keep_prob
    # 32-bit threshold; quantization error <= 2^-32.  inv_keep is cast to
    # x.dtype (for bf16 this carries ~0.4% rounding vs fp32 scaling).
    threshold32 = min(int(round(keep_prob * (1 << 32))), (1 << 32) - 1)
    seed32 = int(seed) & 0x7FFFFFFF

    orig_shape = x.shape
    V = int(orig_shape[-1])
    R = int(np.prod(orig_shape[:-1])) if len(orig_shape) > 1 else 1
    itemsize = jnp.dtype(x.dtype).itemsize

    if use_pallas is None:
        # Tiny tensors: launch/reshape overhead dominates -> plain fused XLA.
        use_pallas = x.size * itemsize >= (1 << 20)
    if not use_pallas:
        keep = _keep_mask_flat(R, seed32, threshold32).reshape(orig_shape[:-1])
        scale = jnp.where(keep, jnp.asarray(inv_keep, x.dtype),
                          jnp.asarray(0, x.dtype))
        return x * scale[..., None]

    # ---------------- Pallas path ----------------
    G = 128 // math.gcd(V, 128)          # vectors per lane-dense row (power of 2)
    log2_g = G.bit_length() - 1
    GV = G * V

    n_rows = _cdiv(R, G)
    x_flat = x.reshape(R, V)
    if R % G:
        # Pad only to a multiple of G (< 128 vectors); no pad-to-tile.
        x_flat = jnp.pad(x_flat, ((0, n_rows * G - R), (0, 0)))
    x2d = x_flat.reshape(n_rows, GV)

    # ~4 MiB per input tile; in+out double-buffered stays under 32 MiB scoped
    # VMEM on v5e/v6e/v7x.  Rows are a multiple of 8 (sublane alignment).
    bytes_per_row = GV * itemsize
    tr_cap = max(8, ((4 * 1024 * 1024) // bytes_per_row) // 8 * 8)
    TR = min(tr_cap, _round_up(n_rows, 8))
    if _cdiv(n_rows, TR) < 2 and n_rows >= 16:
        # Ensure >= 2 grid steps so v7x's two TensorCores both get work.
        TR = max(8, _round_up(_cdiv(n_rows, 2), 8))
    grid = (_cdiv(n_rows, TR),)

    seed_arr = jnp.array([seed32], dtype=jnp.int32)
    # lane -> vector-within-row map (avoids in-kernel integer division by V).
    lane_vec = jnp.asarray((np.arange(GV, dtype=np.int32) // V).reshape(1, GV))

    kernel = functools.partial(_vdropout_kernel, log2_g=log2_g,
                               threshold32=threshold32, inv_keep=inv_keep)

    out2d = pl.pallas_call(
        kernel,
        out_shape=jax.ShapeDtypeStruct((n_rows, GV), x.dtype),
        grid=grid,
        in_specs=[
            pl.BlockSpec(memory_space=pltpu.MemorySpace.SMEM),   # seed scalar
            pl.BlockSpec((1, GV), lambda i: (0, 0)),             # lane->vector map
            pl.BlockSpec((TR, GV), lambda i: (i, 0)),            # x tile
        ],
        out_specs=pl.BlockSpec((TR, GV), lambda i: (i, 0)),
        compiler_params=pltpu.CompilerParams(
            dimension_semantics=("parallel",),
            vmem_limit_bytes=32 * 1024 * 1024),
        cost_estimate=pl.CostEstimate(
            flops=12 * n_rows * GV,
            transcendentals=0,
            bytes_accessed=2 * n_rows * GV * itemsize),
    )(seed_arr, lane_vec, x2d)

    if R % G:
        return out2d.reshape(n_rows * G, V)[:R].reshape(orig_shape)
    return out2d.reshape(orig_shape)


if __name__ == "__main__":
    key = jax.random.PRNGKey(0)
    # x: [batch=2, nodes=16, vector_channels=32, vector_dim=3]
    x = jax.random.normal(key, (2, 16, 32, 3), dtype=jnp.float32)
    drop_rate = 0.2
    keep = 1.0 - drop_rate

    # Force the Pallas path (the auto heuristic would route this tiny demo
    # tensor to the plain-JAX fast path).
    out = jax.block_until_ready(
        vdropout(x, drop_rate, seed=1234, training=True, use_pallas=True))

    # Every vector channel is either fully dropped (all zeros) or scaled 1/keep.
    x_np = np.asarray(x).reshape(-1, 3)
    o_np = np.asarray(out).reshape(-1, 3)
    d_zero = np.max(np.abs(o_np), axis=-1)
    d_kept = np.max(np.abs(o_np - x_np / keep), axis=-1)
    assert np.all(np.minimum(d_zero, d_kept) < 1e-4), "mask/scale semantics violated"

    # Keep fraction roughly keep_prob (loose bound, 1024 vectors).
    kept_frac = float(np.mean(d_kept < 1e-4))
    assert abs(kept_frac - keep) < 0.1, f"keep fraction off: {kept_frac}"

    # The plain-JAX fast path uses the same counter hash -> identical output.
    out_ref = jax.block_until_ready(
        vdropout(x, drop_rate, seed=1234, training=True, use_pallas=False))
    assert np.array_equal(np.asarray(out), np.asarray(out_ref)), "paths disagree"

    # Eval mode is identity.
    out_eval = jax.block_until_ready(
        vdropout(x, drop_rate, seed=1234, training=False))
    assert np.allclose(np.asarray(out_eval), np.asarray(x))

    print("KERNEL_OK")
</pallas_src>

<mosaic_0001>
module attributes {stable_mosaic.version = 11 : i64} {
  func.func @_vdropout_kernel(%arg0: i32, %arg1: memref<1xi32, #tpu.memory_space<smem>>, %arg2: memref<1x384xi32, #tpu.memory_space<vmem>>, %arg3: memref<8x384xf32, #tpu.memory_space<vmem>>, %arg4: memref<8x384xf32, #tpu.memory_space<vmem>>) attributes {dimension_semantics = [#tpu.dimension_semantics<parallel>], iteration_bounds = array<i64: 1>, scalar_prefetch = 0 : i64, scratch_operands = 0 : i64, tpu.core_type = #tpu.core_type<tc>, window_params = [{transform_indices = @transform_0, window_bounds = array<i64: 1>}, {pipeline_mode = #tpu.pipeline_mode<synchronous>, transform_indices = @transform_1, window_bounds = array<i64: 1, 384>}, {transform_indices = @transform_2, window_bounds = array<i64: 8, 384>}, {transform_indices = @transform_3, window_bounds = array<i64: 8, 384>}]} {
    %c8_i32 = arith.constant 8 : i32
    %0 = arith.muli %arg0, %c8_i32 : i32
    %c0 = arith.constant 0 : index
    %1 = memref.load %arg1[%c0] : memref<1xi32, #tpu.memory_space<smem>>
    %2 = tpu.iota {dimensions = array<i32: 0>} : vector<8x384xi32>
    %3 = vector.broadcast %0 : i32 to vector<8x384xi32>
    %4 = arith.addi %3, %2 : vector<8x384xi32>
    %c7_i32 = arith.constant 7 : i32
    %5 = vector.broadcast %c7_i32 : i32 to vector<8x384xi32>
    %6 = arith.shli %4, %5 : vector<8x384xi32>
    %c0_0 = arith.constant 0 : index
    %c0_1 = arith.constant 0 : index
    %7 = vector.load %arg2[%c0_0, %c0_1] : memref<1x384xi32, #tpu.memory_space<vmem>>, vector<1x384xi32>
    %8 = vector.broadcast %7 : vector<1x384xi32> to vector<8x384xi32>
    %9 = arith.addi %6, %8 : vector<8x384xi32>
    %10 = tpu.bitcast %9 : vector<8x384xi32> -> vector<8x384xi32>
    %11 = vector.broadcast %1 : i32 to vector<8x384xi32>
    %12 = arith.addi %10, %11 : vector<8x384xi32>
    %c-1640531535_i32 = arith.constant -1640531535 : i32
    %13 = vector.broadcast %c-1640531535_i32 : i32 to vector<8x384xi32>
    %14 = arith.muli %12, %13 : vector<8x384xi32>
    %c16_i32 = arith.constant 16 : i32
    %15 = vector.broadcast %c16_i32 : i32 to vector<8x384xi32>
    %16 = arith.shrui %14, %15 : vector<8x384xi32>
    %17 = arith.xori %14, %16 : vector<8x384xi32>
    %c569420461_i32 = arith.constant 569420461 : i32
    %18 = vector.broadcast %c569420461_i32 : i32 to vector<8x384xi32>
    %19 = arith.muli %17, %18 : vector<8x384xi32>
    %c15_i32 = arith.constant 15 : i32
    %20 = vector.broadcast %c15_i32 : i32 to vector<8x384xi32>
    %21 = arith.shrui %19, %20 : vector<8x384xi32>
    %22 = arith.xori %19, %21 : vector<8x384xi32>
    %c-858993459_i32 = arith.constant -858993459 : i32
    %23 = vector.broadcast %c-858993459_i32 : i32 to vector<8x384xi32>
    %24 = arith.cmpi ult, %22, %23 : vector<8x384xi32>
    %cst = arith.constant 1.250000e+00 : f32
    %cst_2 = arith.constant 0.000000e+00 : f32
    %25 = vector.broadcast %cst : f32 to vector<8x384xf32>
    %26 = vector.broadcast %cst_2 : f32 to vector<8x384xf32>
    %27 = arith.select %24, %25, %26 : vector<8x384xi1>, vector<8x384xf32>
    %c0_3 = arith.constant 0 : index
    %c0_4 = arith.constant 0 : index
    %28 = vector.load %arg3[%c0_3, %c0_4] : memref<8x384xf32, #tpu.memory_space<vmem>>, vector<8x384xf32>
    %29 = arith.mulf %28, %27 : vector<8x384xf32>
    %c0_5 = arith.constant 0 : index
    %c0_6 = arith.constant 0 : index
    %30 = vector.load %arg4[%c0_5, %c0_6] : memref<8x384xf32, #tpu.memory_space<vmem>>, vector<8x384xf32>
    tpu.vector_store %arg4[%c0_5, %c0_6], %29 {strides = array<i32>} : memref<8x384xf32, #tpu.memory_space<vmem>>, vector<8x384xf32>,
    return
  }
  func.func @transform_0(%arg0: i32) -> i32 {
    %c0_i32 = arith.constant 0 : i32
    %c0_i32_0 = arith.constant 0 : i32
    return %c0_i32 : i32
  }
  func.func @transform_1(%arg0: i32) -> (i32, i32) {
    %c0_i32 = arith.constant 0 : i32
    %c0_i32_0 = arith.constant 0 : i32
    %c0_i32_1 = arith.constant 0 : i32
    return %c0_i32, %c0_i32_0 : i32, i32
  }
  func.func @transform_2(%arg0: i32) -> (i32, i32) {
    %c0_i32 = arith.constant 0 : i32
    %c0_i32_0 = arith.constant 0 : i32
    return %arg0, %c0_i32 : i32, i32
  }
  func.func @transform_3(%arg0: i32) -> (i32, i32) {
    %c0_i32 = arith.constant 0 : i32
    %c0_i32_0 = arith.constant 0 : i32
    return %arg0, %c0_i32 : i32, i32
  }
}

</mosaic_0001>

<llo_original>
// kernel: tpu_custom_call.1
$region0: #{tpu_custom_call.1}
  #allocation0 [shape = 'u32[]', space=smem, size = 0x4, offset = 0x4, fixed_abs, tag = 'smem constant byte address 0x4 - core index']
  #allocation1 [shape = 'u32[144,128]{1,0:T(1,128)}', space=vmem, size = 0x12000, scoped, tag = 'internal scratch']
  #allocation2 [shape = 's32[1]{0:T(128)S(6)}', space=smem, size = 0x200, scoped, tag = 'scoped memory for tpu_custom_call.1']
  %s0 = inlined_call_operand.<no memory space> [shape: s32[1], index: 0, kind: input, shape index: {}]
  %s1 = inlined_call_operand.vmem [shape: s32[1,384], index: 1, kind: input, shape index: {}]
  %s2 = inlined_call_operand.hbm [shape: f32[8,384], index: 2, kind: input, shape index: {}]
  %s3 = inlined_call_operand.hbm [shape: f32[8,384], index: 3, kind: output, shape index: {}]
  %s4 = sld [smem:[#allocation0]]
  $region26: #{tpu_custom_call.1} parent=0
    _
  %s6 = ssub.s32 1, %s4
  %s7 = scalar_select 0, %s6, %s4
  %8 = sst [smem:[#allocation2]] %s0
  $region1: #{tpu_custom_call.1} parent=0
    #allocation3 [shape = 'u8[12288]{0}', space=vmem, size = 0x3000, scoped, tag = 'input window, operand 2, single buffered']
    #allocation4 [shape = 's32[1]{0}', space=sflag, size = 0x4, scoped, tag = 'scoped memory for tpu_custom_call.1']
    #allocation5 [shape = 's32[1]{0}', space=sflag, size = 0x4, scoped, tag = 'scoped memory for tpu_custom_call.1']
    #allocation6 [shape = 'u8[12288]{0}', space=vmem, size = 0x3000, scoped, tag = 'output window, operand 0, single buffered']
    %9 = vsyncpa [#allocation4], 0
    %10 = vsyncpa [#allocation5], 0
    // Predicated region
    $region2: #{tpu_custom_call.1} parent=1 // pred_check
      _
    $region3: #{tpu_custom_call.1} parent=1 // pred_check_branch
      %12 = sbr.rel (0) target = $region5
    $region4: #{tpu_custom_call.1} parent=1 // pred_region
      _
    $region5: #{tpu_custom_call.1} parent=1 // pred_fallthru
      _
    // Predicated region
    $region6: #{tpu_custom_call.1} parent=1 // pred_check
      _
    $region7: #{tpu_custom_call.1} parent=1 // pred_check_branch
      %14 = sbr.rel (0) target = $region9
    $region8: #{tpu_custom_call.1} parent=1 // pred_region
      _
    $region9: #{tpu_custom_call.1} parent=1 // pred_fallthru
      _
    // Predicated region
    $region10: #{tpu_custom_call.1} parent=1 // pred_check
      _
    $region11: #{tpu_custom_call.1} parent=1 // pred_check_branch
      %16 = sbr.rel (0) target = $region13
    $region12: #{tpu_custom_call.1} parent=1 // pred_region
      %s18 = ssub.s32 384, 384
      %19 = vsyncadd [#allocation4], %s18
      %s21 = sshll.u32 [#allocation3], 4
      %s22 = int_to_ptr.vmem [resolvable:$true] %s21
      %24 = dma.hbm_to_vmem [thread:$0]  %s2, 384, %s22, [#allocation4]
    $region13: #{tpu_custom_call.1} parent=1 // pred_fallthru
      _
    // Predicated region
    $region14: #{tpu_custom_call.1} parent=1 // pred_check
      _
    $region15: #{tpu_custom_call.1} parent=1 // pred_check_branch
      %26 = sbr.rel (0) target = $region17
    $region16: #{tpu_custom_call.1} parent=1 // pred_region
      %27 = dma.done [#allocation4], 384
    $region17: #{tpu_custom_call.1} parent=1 // pred_fallthru
      _
    %s28 = smul.u32 0, 8
    %s29 = sld [smem:[#allocation2]]
    %v30 = vlaneseq
    %v31 = vshrl.u32 %v30, 7
    %v32 = vstv %s28
    %v33 = vadd.s32 %v32, %v31
    %v34 = vshll.u32 %v33, 7
    %v35 = vld [vmem:[%s1] sm:$0x7]
    %v36 = vlaneseq
    %v37 = vshrl.u32 %v36, 7
    %v38 = vsub.s32 0, %v37
    %v39 = vrot.slane %v35, %v38
    %v40 = vlaneseq
    %v41 = vshrl.u32 %v40, 7
    %v42 = vsub.s32 1, %v41
    %v43 = vrot.slane %v35, %v42
    %v44 = vlaneseq
    %v45 = vshrl.u32 %v44, 7
    %v46 = vsub.s32 2, %v45
    %v47 = vrot.slane %v35, %v46
    %v48 = vadd.s32 %v34, %v39
    %v49 = vadd.s32 %v34, %v43
    %v50 = vadd.s32 %v34, %v47
    %v51 = vstv %s29
    %v52 = vadd.s32 %v48, %v51
    %v53 = vadd.s32 %v49, %v51
    %v54 = vadd.s32 %v50, %v51
    %v55 = vmul.u32 %v52, 2654435761
    %v56 = vmul.u32 %v53, 2654435761
    %v57 = vmul.u32 %v54, 2654435761
    %v58 = vshrl.u32 %v55, 16
    %v59 = vshrl.u32 %v56, 16
    %v60 = vshrl.u32 %v57, 16
    %v61 = vxor.u32 %v55, %v58
    %v62 = vxor.u32 %v56, %v59
    %v63 = vxor.u32 %v57, %v60
    %v64 = vmul.u32 %v61, 569420461
    %v65 = vmul.u32 %v62, 569420461
    %v66 = vmul.u32 %v63, 569420461
    %v67 = vshrl.u32 %v64, 15
    %v68 = vshrl.u32 %v65, 15
    %v69 = vshrl.u32 %v66, 15
    %v70 = vxor.u32 %v64, %v67
    %v71 = vxor.u32 %v65, %v68
    %v72 = vxor.u32 %v66, %v69
    %vm73 = vcmp.lt.u32.totalorder %v70, 3435973837
    %vm74 = vcmp.lt.u32.totalorder %v71, 3435973837
    %vm75 = vcmp.lt.u32.totalorder %v72, 3435973837
    %v76 = vsel %vm73, 1.25, 0.0
    %v77 = vsel %vm74, 1.25, 0.0
    %v78 = vsel %vm75, 1.25, 0.0
    %v79 = vld [vmem:[#allocation3] sm:$0xff]
    %v80 = vld [vmem:[#allocation3 + $0x8] sm:$0xff]
    %v81 = vld [vmem:[#allocation3 + $0x10] sm:$0xff]
    %v82 = vmul.f32 %v79, %v76
    %v83 = vmul.f32 %v80, %v77
    %v84 = vmul.f32 %v81, %v78
    %85 = vst [vmem:[#allocation6] sm:$0xff] %v82
    %86 = vst [vmem:[#allocation6 + $0x8] sm:$0xff] %v83
    %87 = vst [vmem:[#allocation6 + $0x10] sm:$0xff] %v84
    // Predicated region
    $region18: #{tpu_custom_call.1} parent=1 // pred_check
      _
    $region19: #{tpu_custom_call.1} parent=1 // pred_check_branch
      %89 = sbr.rel (0) target = $region21
    $region20: #{tpu_custom_call.1} parent=1 // pred_region
      %s91 = ssub.s32 384, 384
      %92 = vsyncadd [#allocation5], %s91
      %s94 = sshll.u32 [#allocation6], 4
      %s95 = int_to_ptr.vmem [resolvable:$true] %s94
      %97 = dma.vmem_to_hbm [thread:$0]  %s95, 384, %s3, [#allocation5]
    $region21: #{tpu_custom_call.1} parent=1 // pred_fallthru
      _
    // Predicated region
    $region22: #{tpu_custom_call.1} parent=1 // pred_check
      _
    $region23: #{tpu_custom_call.1} parent=1 // pred_check_branch
      %99 = sbr.rel (0) target = $region25
    $region24: #{tpu_custom_call.1} parent=1 // pred_region
      %100 = dma.done [#allocation5], 384
    $region25: #{tpu_custom_call.1} parent=1 // pred_fallthru
      _
    %101 = vsyncpa [#allocation4], 1
    %102 = vsyncpa [#allocation5], 1

</llo_original>
